<compile_context>
chip_gen: v7x
topology: tpu7x:2x2x1
jax: 0.10.0
libtpu: 0.0.40
codegen_flags: <defaults>
</compile_context>

<pallas_src>
import functools

import jax
import jax.numpy as jnp
from jax.experimental import pallas as pl
from jax.experimental.pallas import tpu as pltpu


def _round_up(v, m):
    return ((v + m - 1) // m) * m


def _vmem_budget_bytes():
    """~75% of physical per-core VMEM (96 MiB v5e/v6e, 48 MiB v7x); safe fallback."""
    cap = 64 * 1024 * 1024
    try:
        info = pltpu.get_tpu_info()
        cap = int(getattr(info, "vmem_capacity_bytes", cap)) or cap
    except Exception:
        pass
    return (cap * 3) // 4


# ----------------------------- kernels --------------------------------------


def _dense_kernel_single_k(x_ref, w_ref, b_ref, o_ref):
    # Whole K in one block: no accumulator machinery, one MXU dot + bias + store.
    o_ref[...] = (
        jnp.dot(x_ref[...], w_ref[...], preferred_element_type=jnp.float32)
        + b_ref[...]
    ).astype(o_ref.dtype)


def _dense_kernel_multi_k_f32(x_ref, w_ref, b_ref, o_ref):
    # f32 output: the output block index is constant across k, so the block is
    # VMEM-resident -> accumulate directly into it (no scratch, no final copy).
    k = pl.program_id(2)

    @pl.when(k == 0)
    def _():
        o_ref[...] = jnp.zeros_like(o_ref)

    o_ref[...] += jnp.dot(x_ref[...], w_ref[...], preferred_element_type=jnp.float32)

    @pl.when(k == pl.num_programs(2) - 1)
    def _():
        o_ref[...] += b_ref[...]


def _dense_kernel_multi_k_scratch(x_ref, w_ref, b_ref, o_ref, acc_ref):
    # Non-f32 output: keep a resident f32 scratch accumulator, cast at the end.
    k = pl.program_id(2)

    @pl.when(k == 0)
    def _():
        acc_ref[...] = jnp.zeros_like(acc_ref)

    acc_ref[...] += jnp.dot(x_ref[...], w_ref[...], preferred_element_type=jnp.float32)

    @pl.when(k == pl.num_programs(2) - 1)
    def _():
        o_ref[...] = (acc_ref[...] + b_ref[...]).astype(o_ref.dtype)


# ----------------------------- wrapper --------------------------------------


def prepare_dense_params(weight, bias, *, tn_max=512, tk_max=2048, compute_dtype=None):
    """One-time parameter prep (call at init, NOT per forward step).

    Transposes the PyTorch-layout weight to (K, N) and pads N (and K, only
    when K is large enough to be tiled) to lane/tile-friendly multiples, so
    the forward path never touches the weight except for the kernel's DMA.
    """
    N, K = weight.shape

    # N: lane-dense (128); for large N, a multiple of the N tile.
    Np = _round_up(N, 128)
    if Np > tn_max:
        Np = _round_up(N, tn_max)

    # K: keep full-extent (no padding, no K grid axis) unless K is large.
    Kp = K if K <= tk_max else _round_up(K, tk_max)

    wT = weight.T  # (K, N): plain jnp.dot inside the kernel, no per-tile transpose
    if compute_dtype is not None:
        wT = wT.astype(compute_dtype)
    if (Kp, Np) != (K, N):
        wT = jnp.pad(wT, ((0, Kp - K), (0, Np - N)))

    b_p = bias if Np == N else jnp.pad(bias, (0, Np - N))
    b_p = b_p.astype(jnp.float32).reshape(1, Np)  # bias stays f32 (added to f32 acc)

    return {"wT": jax.device_put(wT), "b": jax.device_put(b_p), "out_dim": N}


@functools.partial(
    jax.jit,
    static_argnames=("out_dim", "tm_max", "tn_max", "tk_max", "compute_dtype"),
)
def dense_forward(x, wT_p, b_p, out_dim, *, tm_max=512, tn_max=512, tk_max=2048,
                  compute_dtype=None):
    """Pallas equivalent of nn.Linear(input_dim, output_dim)(x)[..., None, None].

    x     : (B, input_dim)
    wT_p  : (Kp, Np)  transposed + padded weight from prepare_dense_params
    b_p   : (1, Np)   padded bias
    returns (B, out_dim, 1, 1)
    """
    B, K = x.shape
    Kp, Np = wT_p.shape
    out_dtype = x.dtype

    if compute_dtype is not None:
        x = x.astype(compute_dtype)

    # ---- tile sizes ---------------------------------------------------------
    # M: full-extent single block when B is small (no M padding at all).
    if B <= tm_max:
        tm, Mp = B, B
    else:
        tm = tm_max
        Mp = _round_up(B, tm)

    # N: Np was padded at prep time to a multiple of 128 (and of tn_max when
    # larger), so any 128-multiple divisor of Np is a valid tn.
    tn = min(tn_max, Np)

    # K: single full-extent block when the weight wasn't K-padded at prep.
    single_k = (Kp == K)
    tk = Kp if single_k else tk_max

    # v7x: if the parallel (M, N) grid is 1x1, split N so both TCs get work.
    if Mp // tm == 1 and Np // tn == 1 and Np >= 256:
        half_n = ((Np // 2) // 128) * 128
        if half_n >= 128 and Np % half_n == 0:
            tn = half_n
        # TODO(synk): also split M (with 8-aligned padding) when N cannot be split.

    # ---- per-call x padding only (weight padding was hoisted to init) ------
    x_p = x
    if Mp != B or Kp != K:
        x_p = jnp.pad(x, ((0, Mp - B), (0, Kp - K)))

    # ---- VMEM budget / footprint -------------------------------------------
    xb = x_p.dtype.itemsize
    wb = wT_p.dtype.itemsize
    ob = out_dtype.itemsize
    use_scratch = (not single_k) and (out_dtype != jnp.float32)

    def footprint(tm_, tn_, tk_):
        f = 2 * (tm_ * tk_ * xb + tk_ * tn_ * wb + tm_ * tn_ * ob) + 2 * tn_ * 4
        if use_scratch:
            f += tm_ * tn_ * 4
        return f

    budget = _vmem_budget_bytes()
    while (not single_k) and footprint(tm, tn, tk) > budget and tk > 512:
        tk //= 2                       # still divides Kp (multiple of tk_max)
    while footprint(tm, tn, tk) > budget and tn % 256 == 0:
        tn //= 2                       # stays a 128-multiple divisor of Np
    vmem_limit = int(min(max(2 * footprint(tm, tn, tk), 32 * 1024 * 1024), budget))

    gm, gn = Mp // tm, Np // tn

    # ---- grid / specs -------------------------------------------------------
    if single_k:
        grid = (gm, gn)
        in_specs = [
            pl.BlockSpec((tm, tk), lambda i, j: (i, 0)),   # x
            pl.BlockSpec((tk, tn), lambda i, j: (0, j)),   # weight (K, N) layout
            pl.BlockSpec((1, tn), lambda i, j: (0, j)),    # bias
        ]
        out_spec = pl.BlockSpec((tm, tn), lambda i, j: (i, j))
        kernel = _dense_kernel_single_k
        scratch = []
        dims = ("parallel", "parallel")
    else:
        grid = (gm, gn, Kp // tk)
        in_specs = [
            pl.BlockSpec((tm, tk), lambda i, j, k: (i, k)),
            pl.BlockSpec((tk, tn), lambda i, j, k: (k, j)),
            pl.BlockSpec((1, tn), lambda i, j, k: (0, j)),
        ]
        out_spec = pl.BlockSpec((tm, tn), lambda i, j, k: (i, j))
        if out_dtype == jnp.float32:
            kernel = _dense_kernel_multi_k_f32
            scratch = []
        else:
            kernel = _dense_kernel_multi_k_scratch
            scratch = [pltpu.VMEM((tm, tn), jnp.float32)]
        dims = ("parallel", "parallel", "arbitrary")

    out_p = pl.pallas_call(
        kernel,
        out_shape=jax.ShapeDtypeStruct((Mp, Np), out_dtype),
        grid_spec=pltpu.PrefetchScalarGridSpec(
            num_scalar_prefetch=0,
            grid=grid,
            in_specs=in_specs,
            out_specs=out_spec,
            scratch_shapes=scratch,
        ),
        compiler_params=pltpu.CompilerParams(
            dimension_semantics=dims,
            vmem_limit_bytes=vmem_limit,
        ),
        cost_estimate=pl.CostEstimate(
            flops=2 * Mp * Np * Kp,
            transcendentals=0,
            bytes_accessed=(Mp * Kp * xb + Kp * Np * wb + Mp * Np * ob + Np * 4),
        ),
    )(x_p, wT_p, b_p)

    # Strip padding, then glue: reshape to feature-map form (B, out_dim, 1, 1).
    out = out_p[:B, :out_dim]
    return out[..., None, None]


if __name__ == "__main__":
    key = jax.random.PRNGKey(0)
    B, input_dim, output_dim = 2, 32, 64

    kx, kw, kb = jax.random.split(key, 3)
    x = jax.random.normal(kx, (B, input_dim), dtype=jnp.float32)
    # Deterministic init mimicking PyTorch Linear default: U(-1/sqrt(fan_in), 1/sqrt(fan_in))
    bound = 1.0 / (input_dim ** 0.5)
    weight = jax.random.uniform(kw, (output_dim, input_dim), dtype=jnp.float32,
                                minval=-bound, maxval=bound)
    bias = jax.random.uniform(kb, (output_dim,), dtype=jnp.float32,
                              minval=-bound, maxval=bound)

    # One-time parameter prep (weight transpose + padding hoisted out of forward).
    params = prepare_dense_params(weight, bias)

    y = dense_forward(x, params["wT"], params["b"], out_dim=params["out_dim"])
    jax.block_until_ready(y)

    # Reference check (plain JAX)
    y_ref = (x @ weight.T + bias)[..., None, None]
    assert y.shape == (B, output_dim, 1, 1)
    assert jnp.allclose(y, y_ref, atol=1e-5, rtol=1e-5)

    print("KERNEL_OK")
</pallas_src>

<mosaic_0001>
module attributes {stable_mosaic.version = 11 : i64} {
  func.func @_dense_kernel_single_k(%arg0: i32, %arg1: i32, %arg2: memref<2x32xf32, #tpu.memory_space<vmem>>, %arg3: memref<32x128xf32, #tpu.memory_space<vmem>>, %arg4: memref<1x128xf32, #tpu.memory_space<vmem>>, %arg5: memref<2x128xf32, #tpu.memory_space<vmem>>) attributes {dimension_semantics = [#tpu.dimension_semantics<parallel>, #tpu.dimension_semantics<parallel>], iteration_bounds = array<i64: 1, 1>, scalar_prefetch = 0 : i64, scratch_operands = 0 : i64, tpu.core_type = #tpu.core_type<tc>, window_params = [{transform_indices = @transform_0, window_bounds = array<i64: 2, 32>}, {transform_indices = @transform_1, window_bounds = array<i64: 32, 128>}, {transform_indices = @transform_2, window_bounds = array<i64: 1, 128>}, {transform_indices = @transform_3, window_bounds = array<i64: 2, 128>}]} {
    %c0 = arith.constant 0 : index
    %c0_0 = arith.constant 0 : index
    %0 = vector.load %arg2[%c0, %c0_0] : memref<2x32xf32, #tpu.memory_space<vmem>>, vector<2x32xf32>
    %c0_1 = arith.constant 0 : index
    %c0_2 = arith.constant 0 : index
    %1 = vector.load %arg3[%c0_1, %c0_2] : memref<32x128xf32, #tpu.memory_space<vmem>>, vector<32x128xf32>
    %cst = arith.constant dense<0.000000e+00> : vector<2x128xf32>
    %2 = tpu.matmul %0, %1, %cst {dimension_numbers = #tpu.dot_dimension_numbers<[1], [0], [0], [1], [0, 0, 1, 1], [], []>} : vector<2x32xf32>, vector<32x128xf32>, vector<2x128xf32> -> vector<2x128xf32>
    %c0_3 = arith.constant 0 : index
    %c0_4 = arith.constant 0 : index
    %3 = vector.load %arg4[%c0_3, %c0_4] : memref<1x128xf32, #tpu.memory_space<vmem>>, vector<1x128xf32>
    %4 = vector.broadcast %3 : vector<1x128xf32> to vector<2x128xf32>
    %5 = arith.addf %2, %4 : vector<2x128xf32>
    %c0_5 = arith.constant 0 : index
    %c0_6 = arith.constant 0 : index
    %6 = vector.load %arg5[%c0_5, %c0_6] : memref<2x128xf32, #tpu.memory_space<vmem>>, vector<2x128xf32>
    tpu.vector_store %arg5[%c0_5, %c0_6], %5 {strides = array<i32>} : memref<2x128xf32, #tpu.memory_space<vmem>>, vector<2x128xf32>,
    return
  }
  func.func @transform_0(%arg0: i32, %arg1: i32) -> (i32, i32) {
    %c0_i32 = arith.constant 0 : i32
    %c0_i32_0 = arith.constant 0 : i32
    return %arg0, %c0_i32 : i32, i32
  }
  func.func @transform_1(%arg0: i32, %arg1: i32) -> (i32, i32) {
    %c0_i32 = arith.constant 0 : i32
    %c0_i32_0 = arith.constant 0 : i32
    return %c0_i32, %arg1 : i32, i32
  }
  func.func @transform_2(%arg0: i32, %arg1: i32) -> (i32, i32) {
    %c0_i32 = arith.constant 0 : i32
    %c0_i32_0 = arith.constant 0 : i32
    return %c0_i32, %arg1 : i32, i32
  }
  func.func @transform_3(%arg0: i32, %arg1: i32) -> (i32, i32) {
    %c0_i32 = arith.constant 0 : i32
    return %arg0, %arg1 : i32, i32
  }
}

</mosaic_0001>

<llo_original>
// kernel: dense_forward.1
$region0: #{dense_forward.1}
  #allocation0 [shape = 'u32[]', space=smem, size = 0x4, offset = 0x4, fixed_abs, tag = 'smem constant byte address 0x4 - core index']
  #allocation1 [shape = 'u32[144,128]{1,0:T(1,128)}', space=vmem, size = 0x12000, scoped, tag = 'internal scratch']
  %s0 = inlined_call_operand.hbm [shape: f32[2,32], index: 0, kind: input, shape index: {}]
  %s1 = inlined_call_operand.hbm [shape: f32[32,128], index: 1, kind: input, shape index: {}]
  %s2 = inlined_call_operand.vmem [shape: f32[1,128], index: 2, kind: input, shape index: {}]
  %s3 = inlined_call_operand.hbm [shape: f32[2,128], index: 3, kind: output, shape index: {}]
  %s4 = sld [smem:[#allocation0]]
  $region30: #{dense_forward.1} parent=0
    _
  %s6 = ssub.s32 1, %s4
  %s7 = scalar_select 0, %s6, %s4
  $region1: #{dense_forward.1} parent=0
    #allocation2 [shape = 'u8[1024]{0}', space=vmem, size = 0x400, scoped, tag = 'input window, operand 0, single buffered']
    #allocation3 [shape = 's32[1]{0}', space=sflag, size = 0x4, scoped, tag = 'scoped memory for dense_forward.1']
    #allocation4 [shape = 's32[1]{0}', space=sflag, size = 0x4, scoped, tag = 'scoped memory for dense_forward.1']
    #allocation5 [shape = 'u8[16384]{0}', space=vmem, size = 0x4000, scoped, tag = 'input window, operand 1, single buffered']
    #allocation6 [shape = 's32[1]{0}', space=sflag, size = 0x4, scoped, tag = 'scoped memory for dense_forward.1']
    #allocation7 [shape = 'u8[1024]{0}', space=vmem, size = 0x400, scoped, tag = 'output window, operand 0, single buffered']
    %8 = vsyncpa [#allocation3], 0
    %9 = vsyncpa [#allocation6], 0
    %10 = vsyncpa [#allocation4], 0
    // Predicated region
    $region2: #{dense_forward.1} parent=1 // pred_check
      _
    $region3: #{dense_forward.1} parent=1 // pred_check_branch
      %12 = sbr.rel (0) target = $region5
    $region4: #{dense_forward.1} parent=1 // pred_region
      %s14 = ssub.s32 32, 32
      %15 = vsyncadd [#allocation3], %s14
      %s17 = sshll.u32 [#allocation2], 4
      %s18 = int_to_ptr.vmem [resolvable:$true] %s17
      %20 = dma.hbm_to_vmem [thread:$0]  %s0, 32, %s18, [#allocation3]
    $region5: #{dense_forward.1} parent=1 // pred_fallthru
      _
    // Predicated region
    $region6: #{dense_forward.1} parent=1 // pred_check
      _
    $region7: #{dense_forward.1} parent=1 // pred_check_branch
      %22 = sbr.rel (0) target = $region9
    $region8: #{dense_forward.1} parent=1 // pred_region
      %s24 = ssub.s32 512, 512
      %25 = vsyncadd [#allocation6], %s24
      %s26 = sshll.u32 [#allocation5], 4
      %s27 = int_to_ptr.vmem [resolvable:$true] %s26
      %32 = dma.hbm_to_vmem [thread:$0]  %s1, 512, %s27, [#allocation6], 128, 128, 8
    $region9: #{dense_forward.1} parent=1 // pred_fallthru
      _
    // Predicated region
    $region10: #{dense_forward.1} parent=1 // pred_check
      _
    $region11: #{dense_forward.1} parent=1 // pred_check_branch
      %34 = sbr.rel (0) target = $region13
    $region12: #{dense_forward.1} parent=1 // pred_region
      _
    $region13: #{dense_forward.1} parent=1 // pred_fallthru
      _
    // Predicated region
    $region14: #{dense_forward.1} parent=1 // pred_check
      _
    $region15: #{dense_forward.1} parent=1 // pred_check_branch
      %36 = sbr.rel (0) target = $region17
    $region16: #{dense_forward.1} parent=1 // pred_region
      %37 = dma.done [#allocation3], 32
    $region17: #{dense_forward.1} parent=1 // pred_fallthru
      _
    // Predicated region
    $region18: #{dense_forward.1} parent=1 // pred_check
      _
    $region19: #{dense_forward.1} parent=1 // pred_check_branch
      %39 = sbr.rel (0) target = $region21
    $region20: #{dense_forward.1} parent=1 // pred_region
      %40 = dma.done [#allocation6], 512
    $region21: #{dense_forward.1} parent=1 // pred_fallthru
      _
    %v41 = vld [vmem:[#allocation2] sm:$0x3]
    %v42 = vld [vmem:[#allocation5] sm:$0xff]
    %v43 = vld [vmem:[#allocation5 + $0x8] sm:$0xff]
    %v44 = vld [vmem:[#allocation5 + $0x10] sm:$0xff]
    %v45 = vld [vmem:[#allocation5 + $0x18] sm:$0xff]
    %v46 = vld [vmem:[%s2] sm:$0x1]
    %v48 = vlaneseq
    %v49 = vshrl.u32 %v48, 7
    %v50 = vsub.s32 0, %v49
    %v51 = vrot.slane %v46, %v50
    %vm53 = vcmask 261120
    %v55 = vsel %vm53, %v41, 0
    %57 = vmatprep.subr.mxu0 0.0
    %58 = vmatpush1.msra.mxu0 %v42
    %59 = vmatprep.subr.mxu0 0.0
    %60 = vmatpush1.msra.mxu0 %v43
    %61 = vmatprep.subr.mxu0 0.0
    %62 = vmatpush1.msra.mxu0 %v44
    %63 = vmatprep.subr.mxu0 0.0
    %64 = vmatpush1.msra.mxu0 %v45
    %65 = vmatprep.subr.mxu0 0.0
    %66 = vmatpush1.msra.mxu0 0.0
    %67 = vmatprep.subr.mxu0 0.0
    %68 = vmatpush1.msra.mxu0 0.0
    %69 = vmatprep.subr.mxu0 0.0
    %70 = vmatpush1.msra.mxu0 0.0
    %71 = vmatprep.subr.mxu0 0.0
    %72 = vmatpush1.msra.mxu0 0.0
    %73 = vmatprep.subr.mxu0 0.0
    %74 = vmatpush1.msra.mxu0 0.0
    %75 = vmatprep.subr.mxu0 0.0
    %76 = vmatpush1.msra.mxu0 0.0
    %77 = vmatprep.subr.mxu0 0.0
    %78 = vmatpush1.msra.mxu0 0.0
    %79 = vmatprep.subr.mxu0 0.0
    %80 = vmatpush1.msra.mxu0 0.0
    %81 = vmatprep.subr.mxu0 0.0
    %82 = vmatpush1.msra.mxu0 0.0
    %83 = vmatprep.subr.mxu0 0.0
    %84 = vmatpush1.msra.mxu0 0.0
    %85 = vmatprep.subr.mxu0 0.0
    %86 = vmatpush1.msra.mxu0 0.0
    %87 = vmatprep.subr.mxu0 0.0
    %88 = vmatpush1.msra.mxu0 0.0
    %89 = vmatprep.subr.mxu0 0.0
    %90 = vmatpush1.msra.mxu0 0.0
    %91 = vmatprep.subr.mxu0 0.0
    %92 = vmatpush1.msra.mxu0 0.0
    %93 = vmatprep.subr.mxu0 0.0
    %94 = vmatpush1.msra.mxu0 0.0
    %95 = vmatprep.subr.mxu0 0.0
    %96 = vmatpush1.msra.mxu0 0.0
    %97 = vmatprep.subr.mxu0 0.0
    %98 = vmatpush1.msra.mxu0 0.0
    %99 = vmatprep.subr.mxu0 0.0
    %100 = vmatpush1.msra.mxu0 0.0
    %101 = vmatprep.subr.mxu0 0.0
    %102 = vmatpush1.msra.mxu0 0.0
    %103 = vmatprep.subr.mxu0 0.0
    %104 = vmatpush1.msra.mxu0 0.0
    %105 = vmatprep.subr.mxu0 0.0
    %106 = vmatpush1.msra.mxu0 0.0
    %107 = vmatprep.subr.mxu0 0.0
    %108 = vmatpush1.msra.mxu0 0.0
    %109 = vmatprep.subr.mxu0 0.0
    %110 = vmatpush1.msra.mxu0 0.0
    %111 = vmatprep.subr.mxu0 0.0
    %112 = vmatpush1.msra.mxu0 0.0
    %113 = vmatprep.subr.mxu0 0.0
    %114 = vmatpush1.msra.mxu0 0.0
    %115 = vmatprep.subr.mxu0 0.0
    %116 = vmatpush1.msra.mxu0 0.0
    %117 = vmatprep.subr.mxu0 0.0
    %118 = vmatpush1.msra.mxu0 0.0
    %119 = vmatprep.subr.mxu0 0.0
    %120 = vmatpush1.msra.mxu0 0.0
    %121 = vmatprep.mubr.f32.mxu0 0.0
    %122 = vmatmul.mubr.f32.gmra.mrb[0].mxu0 %v55
    %v123 = vpop.f32.mrb[0].mxu0
    %v124 = vadd.f32 %v51, %v123
    %v125 = vpop.f32.mrb[0].mxu0
    %126 = vdwg.mxu0
    %127 = vst [vmem:[#allocation7] sm:$0x3] %v124
    // Predicated region
    $region22: #{dense_forward.1} parent=1 // pred_check
      _
    $region23: #{dense_forward.1} parent=1 // pred_check_branch
      %129 = sbr.rel (0) target = $region25
    $region24: #{dense_forward.1} parent=1 // pred_region
      %s131 = ssub.s32 32, 32
      %132 = vsyncadd [#allocation4], %s131
      %s134 = sshll.u32 [#allocation7], 4
      %s135 = int_to_ptr.vmem [resolvable:$true] %s134
      %137 = dma.vmem_to_hbm [thread:$0]  %s135, 32, %s3, [#allocation4]
    $region25: #{dense_forward.1} parent=1 // pred_fallthru
      _
    // Predicated region
    $region26: #{dense_forward.1} parent=1 // pred_check
      _
    $region27: #{dense_forward.1} parent=1 // pred_check_branch
      %139 = sbr.rel (0) target = $region29
    $region28: #{dense_forward.1} parent=1 // pred_region
      %140 = dma.done [#allocation4], 32
    $region29: #{dense_forward.1} parent=1 // pred_fallthru
      _
    %141 = vsyncpa [#allocation3], 1
    %142 = vsyncpa [#allocation6], 1
    %143 = vsyncpa [#allocation4], 1

</llo_original>
